<compile_context>
chip_gen: v6e
topology: v6e:2x2x1
jax: 0.10.0
libtpu: 0.0.40
codegen_flags: <defaults>
</compile_context>

<pallas_src>
import jax
import jax.numpy as jnp
from jax.experimental import pallas as pl
from jax.experimental.pallas import tpu as pltpu


_TARGET_STEP_BYTES = 4 << 20    # aim: >= ~4 MiB of HBM traffic per grid step
_MAX_NB_UNROLL = 16             # cap on batch elements unrolled inside one step


def _vmem_capacity_bytes():
    try:
        return int(pltpu.get_tpu_info().vmem_capacity_bytes)
    except Exception:
        return 64 << 20         # conservative fallback: v7x per-TC physical VMEM


def _num_tensorcores():
    # Best-effort TensorCore-per-chip count; default 1 (no tile splitting).
    try:
        info = pltpu.get_tpu_info()
    except Exception:
        return 1
    for attr in ("num_cores", "core_count", "num_tensorcores", "cores_per_chip"):
        v = getattr(info, attr, None)
        if isinstance(v, int) and v > 0:
            return v
    return 1


def _outconv_kernel(w_ref, b_ref, x_ref, o_ref):
    # w_ref: (C_out, C_in)    resident (constant block index across the grid)
    # b_ref: (C_out, 1)       resident; broadcasts along the lane (spatial) axis
    # x_ref: (NB, C_in, TS)   NB batch elements x TS contiguous pixels (lane-dense)
    # o_ref: (NB, C_out, TS)
    w = w_ref[...]
    b = b_ref[...]
    nb = x_ref.shape[0]
    # Static unroll over the (small, capped) batch block: NB independent
    # (C_out, C_in) @ (C_in, TS) matmuls -- no in-kernel transposes.
    for i in range(nb):
        acc = jnp.dot(w, x_ref[i], preferred_element_type=jnp.float32)
        o_ref[i] = (acc + b).astype(o_ref.dtype)
    # TODO(synk): for very small C_out/C_in a VPU multiply-add chain could replace
    # the padded MXU push, but this kernel is HBM-bound, so leave it unless a
    # bundle dump shows the matmul path gating the epilogue.


def outconv_pallas(x_nchw, weight, bias):
    """1x1 conv forward, identical semantics to nn.Conv2d(in_ch, out_ch, 1).

    x_nchw: (N, C_in, H, W)
    weight: (C_out, C_in, 1, 1)   -- PyTorch Conv2d weight layout
    bias:   (C_out,)
    returns (N, C_out, H, W)
    """
    N, C_in, H, W = x_nchw.shape
    C_out = weight.shape[0]
    S = H * W
    itemsize = x_nchw.dtype.itemsize

    # Free reshapes only -- no NCHW<->NHWC transposes, no padding copies.
    x3 = x_nchw.reshape(N, C_in, S)
    w_mat = weight.reshape(C_out, C_in)
    b_mat = bias.reshape(C_out, 1)

    # ---- Tile selection ------------------------------------------------------
    # HBM bytes per pixel per batch element (input read + output write).
    bytes_per_px = (C_in + C_out) * itemsize

    # VMEM budget: size against the smallest generation we might run on.
    vmem_cap = _vmem_capacity_bytes()
    # Single-buffer (input+output) block payload cap; blocks get double-buffered.
    max_block_io = max(8 << 20, vmem_cap // 5)

    # Spatial tile: lane-aligned, sized so one batch element alone would hit the
    # byte target when the image is big enough; capped by VMEM and by S itself.
    if S <= 128:
        ts_cap = S                      # full-dim block for tiny images
    else:
        ts_cap = (S // 128) * 128       # largest 128-multiple not exceeding S
    want_px = max(128, _TARGET_STEP_BYTES // bytes_per_px)
    vmem_px = max(128, max_block_io // bytes_per_px)
    ts_eff = min(ts_cap, ((min(want_px, vmem_px) + 127) // 128) * 128)
    ts_eff = max(1, ts_eff)

    # Batch blocking: when H*W alone cannot reach the byte target, pack NB batch
    # elements into one grid step. NB divides N -> no ragged batch tiles.
    step_bytes_one = bytes_per_px * ts_eff
    nb_target = 1
    if step_bytes_one < _TARGET_STEP_BYTES and N > 1:
        nb_target = -(-_TARGET_STEP_BYTES // step_bytes_one)          # ceil div
        nb_target = min(nb_target, N, _MAX_NB_UNROLL,
                        max(1, max_block_io // step_bytes_one))
    nb = 1
    for d in range(int(nb_target), 0, -1):
        if N % d == 0:
            nb = d
            break

    # Megacore (2-TC chips only): make sure the parallel grid exposes >= 2 steps.
    if _num_tensorcores() >= 2:
        total_steps = (N // nb) * pl.cdiv(S, ts_eff)
        if total_steps < 2 and ts_eff >= 256:
            ts_eff = (ts_eff // 2 // 128) * 128

    grid = (N // nb, pl.cdiv(S, ts_eff))

    # VMEM limit: double-buffered x/out blocks + resident weight/bias + headroom.
    block_io_bytes = nb * bytes_per_px * ts_eff
    vmem_limit = 2 * block_io_bytes + C_out * (C_in + 1) * itemsize + (4 << 20)
    vmem_limit = int(min(max(vmem_limit, 32 << 20), (vmem_cap * 3) // 4))

    cost = pl.CostEstimate(
        flops=2 * N * S * C_in * C_out,
        transcendentals=0,
        bytes_accessed=(N * (C_in + C_out) * S * itemsize
                        + C_out * (C_in + 1) * itemsize),
    )

    out3 = pl.pallas_call(
        _outconv_kernel,
        out_shape=jax.ShapeDtypeStruct((N, C_out, S), x_nchw.dtype),
        grid_spec=pltpu.PrefetchScalarGridSpec(
            num_scalar_prefetch=0,
            grid=grid,
            in_specs=[
                # Constant block index -> weight/bias DMA'd once, stay resident.
                pl.BlockSpec((C_out, C_in), lambda n, s: (0, 0)),
                pl.BlockSpec((C_out, 1), lambda n, s: (0, 0)),
                pl.BlockSpec((nb, C_in, ts_eff), lambda n, s: (n, 0, s)),
            ],
            out_specs=pl.BlockSpec((nb, C_out, ts_eff), lambda n, s: (n, 0, s)),
        ),
        compiler_params=pltpu.CompilerParams(
            dimension_semantics=("parallel", "parallel"),
            vmem_limit_bytes=vmem_limit,
        ),
        cost_estimate=cost,
    )(w_mat, b_mat, x3)

    # (N, C_out, S) -> NCHW. Pure reshape, no transpose, no slicing copy.
    return out3.reshape(N, C_out, H, W)


def reference_outconv(x_nchw, weight, bias):
    # Pure-JAX reference: 1x1 conv == einsum over the channel dim.
    w_mat = weight.reshape(weight.shape[0], weight.shape[1])  # (C_out, C_in)
    y = jnp.einsum("nchw,oc->nohw", x_nchw, w_mat)
    return y + bias.reshape(1, -1, 1, 1)


if __name__ == "__main__":
    key = jax.random.PRNGKey(0)
    k_x, k_w, k_b, k_x2 = jax.random.split(key, 4)

    # Primary case (matches the module's intended small shapes).
    N, C_in, H, W = 2, 4, 16, 16
    C_out = 2
    x = jax.random.normal(k_x, (N, C_in, H, W), dtype=jnp.float32)
    weight = jax.random.normal(k_w, (C_out, C_in, 1, 1), dtype=jnp.float32) * 0.1
    bias = jax.random.normal(k_b, (C_out,), dtype=jnp.float32) * 0.1

    out = jax.block_until_ready(outconv_pallas(x, weight, bias))
    ref = reference_outconv(x, weight, bias)
    assert out.shape == (N, C_out, H, W)
    assert jnp.allclose(out, ref, atol=1e-5, rtol=1e-5), "mismatch vs reference"

    # Second case: H*W not a multiple of the spatial tile -> exercises the
    # ragged-last-tile masking path (no jnp.pad, no output slice).
    H2, W2 = 24, 24
    x2 = jax.random.normal(k_x2, (N, C_in, H2, W2), dtype=jnp.float32)
    out2 = jax.block_until_ready(outconv_pallas(x2, weight, bias))
    ref2 = reference_outconv(x2, weight, bias)
    assert out2.shape == (N, C_out, H2, W2)
    assert jnp.allclose(out2, ref2, atol=1e-5, rtol=1e-5), "mismatch vs reference (ragged)"

    print("KERNEL_OK")
</pallas_src>

<mosaic_0001>
module attributes {stable_mosaic.version = 11 : i64} {
  func.func @_outconv_kernel(%arg0: i32, %arg1: i32, %arg2: memref<2x4xf32, #tpu.memory_space<vmem>>, %arg3: memref<2x1xf32, #tpu.memory_space<vmem>>, %arg4: memref<2x4x256xf32, #tpu.memory_space<vmem>>, %arg5: memref<2x2x256xf32, #tpu.memory_space<vmem>>) attributes {dimension_semantics = [#tpu.dimension_semantics<parallel>, #tpu.dimension_semantics<parallel>], iteration_bounds = array<i64: 1, 1>, scalar_prefetch = 0 : i64, scratch_operands = 0 : i64, tpu.core_type = #tpu.core_type<tc>, window_params = [{pipeline_mode = #tpu.pipeline_mode<synchronous>, transform_indices = @transform_0, window_bounds = array<i64: 2, 4>}, {pipeline_mode = #tpu.pipeline_mode<synchronous>, transform_indices = @transform_1, window_bounds = array<i64: 2, 1>}, {transform_indices = @transform_2, window_bounds = array<i64: 2, 4, 256>}, {transform_indices = @transform_3, window_bounds = array<i64: 2, 2, 256>}]} {
    %c0 = arith.constant 0 : index
    %c0_0 = arith.constant 0 : index
    %0 = vector.load %arg2[%c0, %c0_0] : memref<2x4xf32, #tpu.memory_space<vmem>>, vector<2x4xf32>
    %c0_1 = arith.constant 0 : index
    %c0_2 = arith.constant 0 : index
    %1 = vector.load %arg3[%c0_1, %c0_2] : memref<2x1xf32, #tpu.memory_space<vmem>>, vector<2x1xf32>
    %c0_3 = arith.constant 0 : index
    %c0_4 = arith.constant 0 : index
    %c0_5 = arith.constant 0 : index
    %2 = vector.load %arg4[%c0_3, %c0_4, %c0_5] : memref<2x4x256xf32, #tpu.memory_space<vmem>>, vector<1x4x256xf32>
    %3 = vector.shape_cast %2 : vector<1x4x256xf32> to vector<4x256xf32>
    %cst = arith.constant dense<0.000000e+00> : vector<2x256xf32>
    %4 = tpu.matmul %0, %3, %cst {dimension_numbers = #tpu.dot_dimension_numbers<[1], [0], [0], [1], [0, 0, 1, 1], [], []>} : vector<2x4xf32>, vector<4x256xf32>, vector<2x256xf32> -> vector<2x256xf32>
    %5 = vector.broadcast %1 : vector<2x1xf32> to vector<2x256xf32>
    %6 = arith.addf %4, %5 : vector<2x256xf32>
    %c0_6 = arith.constant 0 : index
    %c0_7 = arith.constant 0 : index
    %c0_8 = arith.constant 0 : index
    %7 = vector.load %arg5[%c0_6, %c0_7, %c0_8] : memref<2x2x256xf32, #tpu.memory_space<vmem>>, vector<1x2x256xf32>
    %8 = vector.shape_cast %7 : vector<1x2x256xf32> to vector<2x256xf32>
    %9 = vector.shape_cast %6 : vector<2x256xf32> to vector<1x2x256xf32>
    tpu.vector_store %arg5[%c0_6, %c0_7, %c0_8], %9 {strides = array<i32>} : memref<2x2x256xf32, #tpu.memory_space<vmem>>, vector<1x2x256xf32>,
    %c1 = arith.constant 1 : index
    %c0_9 = arith.constant 0 : index
    %c0_10 = arith.constant 0 : index
    %10 = vector.load %arg4[%c1, %c0_9, %c0_10] : memref<2x4x256xf32, #tpu.memory_space<vmem>>, vector<1x4x256xf32>
    %11 = vector.shape_cast %10 : vector<1x4x256xf32> to vector<4x256xf32>
    %cst_11 = arith.constant dense<0.000000e+00> : vector<2x256xf32>
    %12 = tpu.matmul %0, %11, %cst_11 {dimension_numbers = #tpu.dot_dimension_numbers<[1], [0], [0], [1], [0, 0, 1, 1], [], []>} : vector<2x4xf32>, vector<4x256xf32>, vector<2x256xf32> -> vector<2x256xf32>
    %13 = vector.broadcast %1 : vector<2x1xf32> to vector<2x256xf32>
    %14 = arith.addf %12, %13 : vector<2x256xf32>
    %c1_12 = arith.constant 1 : index
    %c0_13 = arith.constant 0 : index
    %c0_14 = arith.constant 0 : index
    %15 = vector.load %arg5[%c1_12, %c0_13, %c0_14] : memref<2x2x256xf32, #tpu.memory_space<vmem>>, vector<1x2x256xf32>
    %16 = vector.shape_cast %15 : vector<1x2x256xf32> to vector<2x256xf32>
    %17 = vector.shape_cast %14 : vector<2x256xf32> to vector<1x2x256xf32>
    tpu.vector_store %arg5[%c1_12, %c0_13, %c0_14], %17 {strides = array<i32>} : memref<2x2x256xf32, #tpu.memory_space<vmem>>, vector<1x2x256xf32>,
    return
  }
  func.func @transform_0(%arg0: i32, %arg1: i32) -> (i32, i32) {
    %c0_i32 = arith.constant 0 : i32
    %c0_i32_0 = arith.constant 0 : i32
    %c0_i32_1 = arith.constant 0 : i32
    return %c0_i32, %c0_i32_0 : i32, i32
  }
  func.func @transform_1(%arg0: i32, %arg1: i32) -> (i32, i32) {
    %c0_i32 = arith.constant 0 : i32
    %c0_i32_0 = arith.constant 0 : i32
    %c0_i32_1 = arith.constant 0 : i32
    return %c0_i32, %c0_i32_0 : i32, i32
  }
  func.func @transform_2(%arg0: i32, %arg1: i32) -> (i32, i32, i32) {
    %c0_i32 = arith.constant 0 : i32
    %c0_i32_0 = arith.constant 0 : i32
    return %arg0, %c0_i32, %arg1 : i32, i32, i32
  }
  func.func @transform_3(%arg0: i32, %arg1: i32) -> (i32, i32, i32) {
    %c0_i32 = arith.constant 0 : i32
    %c0_i32_0 = arith.constant 0 : i32
    return %arg0, %c0_i32, %arg1 : i32, i32, i32
  }
}

</mosaic_0001>

<llo_original>
// kernel: tpu_custom_call.1
$region0: #{tpu_custom_call.1}
  #allocation0 [shape = 'u32[]', space=smem, size = 0x4, offset = 0x4, fixed_abs, tag = 'smem constant byte address 0x4 - core index']
  #allocation1 [shape = 'u32[144,128]{1,0:T(1,128)}', space=vmem, size = 0x12000, scoped, tag = 'internal scratch']
  %s0 = inlined_call_operand.vmem [shape: f32[2,4], index: 0, kind: input, shape index: {}]
  %s1 = inlined_call_operand.vmem [shape: f32[2,1], index: 1, kind: input, shape index: {}]
  %s2 = inlined_call_operand.hbm [shape: f32[2,4,256], index: 2, kind: input, shape index: {}]
  %s3 = inlined_call_operand.hbm [shape: f32[2,2,256], index: 3, kind: output, shape index: {}]
  %s4 = sld [smem:[#allocation0]]
  $region26: #{tpu_custom_call.1} parent=0
    _
  %s6 = ssub.s32 1, %s4
  %s7 = scalar_select 0, %s6, %s4
  $region1: #{tpu_custom_call.1} parent=0
    #allocation2 [shape = 'u8[8192]{0}', space=vmem, size = 0x2000, scoped, tag = 'input window, operand 2, single buffered']
    #allocation3 [shape = 's32[1]{0}', space=sflag, size = 0x4, scoped, tag = 'scoped memory for tpu_custom_call.1']
    #allocation4 [shape = 's32[1]{0}', space=sflag, size = 0x4, scoped, tag = 'scoped memory for tpu_custom_call.1']
    #allocation5 [shape = 'u8[4096]{0}', space=vmem, size = 0x1000, scoped, tag = 'output window, operand 0, single buffered']
    %8 = vsyncpa [#allocation3], 0
    %9 = vsyncpa [#allocation4], 0
    // Predicated region
    $region2: #{tpu_custom_call.1} parent=1 // pred_check
      _
    $region3: #{tpu_custom_call.1} parent=1 // pred_check_branch
      %11 = sbr.rel (0) target = $region5
    $region4: #{tpu_custom_call.1} parent=1 // pred_region
      _
    $region5: #{tpu_custom_call.1} parent=1 // pred_fallthru
      _
    // Predicated region
    $region6: #{tpu_custom_call.1} parent=1 // pred_check
      _
    $region7: #{tpu_custom_call.1} parent=1 // pred_check_branch
      %13 = sbr.rel (0) target = $region9
    $region8: #{tpu_custom_call.1} parent=1 // pred_region
      _
    $region9: #{tpu_custom_call.1} parent=1 // pred_fallthru
      _
    // Predicated region
    $region10: #{tpu_custom_call.1} parent=1 // pred_check
      _
    $region11: #{tpu_custom_call.1} parent=1 // pred_check_branch
      %15 = sbr.rel (0) target = $region13
    $region12: #{tpu_custom_call.1} parent=1 // pred_region
      %s17 = ssub.s32 256, 256
      %18 = vsyncadd [#allocation3], %s17
      %s19 = sshll.u32 [#allocation2], 4
      %s20 = int_to_ptr.vmem [resolvable:$true] %s19
      %25 = dma.hbm_to_vmem [thread:$0]  %s2, 256, %s20, [#allocation3], 128, 128, 8
    $region13: #{tpu_custom_call.1} parent=1 // pred_fallthru
      _
    // Predicated region
    $region14: #{tpu_custom_call.1} parent=1 // pred_check
      _
    $region15: #{tpu_custom_call.1} parent=1 // pred_check_branch
      %27 = sbr.rel (0) target = $region17
    $region16: #{tpu_custom_call.1} parent=1 // pred_region
      %28 = dma.done [#allocation3], 256
    $region17: #{tpu_custom_call.1} parent=1 // pred_fallthru
      _
    %v29 = vld [vmem:[%s0] sm:$0x3]
    %v30 = vld [vmem:[%s1] sm:$0x3]
    %v31 = vld [vmem:[#allocation2] sm:$0xff]
    %33 = vset.pattern.permute.xlu0 0
    %34 = vperm.xlu0 %33, %v30
    %v35 = vpop.permute.xlu0 %34
    %v38 = vcombine.high %v31, %v31
    %vm39 = vcmask 31744
    %v41 = vsel %vm39, %v29, 0
    %vm43 = vcmask 1043456
    %v44 = vsel %vm43, %v31, 0
    %v46 = vsel %vm43, %v38, 0
    %48 = vmatprep.subr.mxu0 0.0
    %49 = vmatpush1.msra.mxu0 0.0
    %50 = vmatprep.subr.mxu0 0.0
    %51 = vmatpush1.msra.mxu0 0.0
    %52 = vmatprep.subr.mxu0 0.0
    %53 = vmatpush1.msra.mxu0 0.0
    %54 = vmatprep.subr.mxu0 0.0
    %55 = vmatpush1.msra.mxu0 0.0
    %56 = vmatprep.subr.mxu0 0.0
    %57 = vmatpush1.msra.mxu0 0.0
    %58 = vmatprep.subr.mxu0 0.0
    %59 = vmatpush1.msra.mxu0 0.0
    %60 = vmatprep.subr.mxu0 0.0
    %61 = vmatpush1.msra.mxu0 0.0
    %62 = vmatprep.subr.mxu0 0.0
    %63 = vmatpush1.msra.mxu0 0.0
    %64 = vmatprep.subr.mxu0 0.0
    %65 = vmatpush1.msra.mxu0 0.0
    %66 = vmatprep.subr.mxu0 0.0
    %67 = vmatpush1.msra.mxu0 0.0
    %68 = vmatprep.subr.mxu0 0.0
    %69 = vmatpush1.msra.mxu0 0.0
    %70 = vmatprep.subr.mxu0 0.0
    %71 = vmatpush1.msra.mxu0 0.0
    %72 = vmatprep.subr.mxu0 0.0
    %73 = vmatpush1.msra.mxu0 0.0
    %74 = vmatprep.subr.mxu0 0.0
    %75 = vmatpush1.msra.mxu0 0.0
    %76 = vmatprep.subr.mxu0 0.0
    %77 = vmatpush1.msra.mxu0 0.0
    %78 = vmatprep.subr.mxu0 %v46
    %79 = vmatpush1.msra.mxu0 %v44
    %80 = vmatprep.subr.mxu0 0.0
    %81 = vmatpush2.msra.mxu0 0.0
    %82 = vmatprep.subr.mxu0 0.0
    %83 = vmatpush2.msra.mxu0 0.0
    %84 = vmatprep.subr.mxu0 0.0
    %85 = vmatpush2.msra.mxu0 0.0
    %86 = vmatprep.subr.mxu0 0.0
    %87 = vmatpush2.msra.mxu0 0.0
    %88 = vmatprep.subr.mxu0 0.0
    %89 = vmatpush2.msra.mxu0 0.0
    %90 = vmatprep.subr.mxu0 0.0
    %91 = vmatpush2.msra.mxu0 0.0
    %92 = vmatprep.subr.mxu0 0.0
    %93 = vmatpush2.msra.mxu0 0.0
    %94 = vmatprep.subr.mxu0 0.0
    %95 = vmatpush2.msra.mxu0 0.0
    %96 = vmatprep.subr.mxu0 0.0
    %97 = vmatpush2.msra.mxu0 0.0
    %98 = vmatprep.subr.mxu0 0.0
    %99 = vmatpush2.msra.mxu0 0.0
    %100 = vmatprep.subr.mxu0 0.0
    %101 = vmatpush2.msra.mxu0 0.0
    %102 = vmatprep.subr.mxu0 0.0
    %103 = vmatpush2.msra.mxu0 0.0
    %104 = vmatprep.subr.mxu0 0.0
    %105 = vmatpush2.msra.mxu0 0.0
    %106 = vmatprep.subr.mxu0 0.0
    %107 = vmatpush2.msra.mxu0 0.0
    %108 = vmatprep.subr.mxu0 0.0
    %109 = vmatpush2.msra.mxu0 0.0
    %110 = vmatprep.subr.mxu0 0.0
    %111 = vmatpush2.msra.mxu0 0.0
    %112 = vmatprep.mubr.f32.mxu0 0.0
    %113 = vmatmul.mubr.f32.gmra.mxu0 %v41
    %v114 = vpop.f32.mrf.mxu0
    %v115 = vadd.f32 %v35, %v114
    %v116 = vpop.f32.mrf.mxu0
    %v117 = vadd.f32 %v35, %v116
    %118 = vdwg.mxu0
    %v121 = vcombine.low %v115, %v117
    %v123 = vunpack.c.l.s4 1983009808
    %v124 = vunpack.c.0.s8 %v123
    %v125 = vlaneseq
    %v126 = vshrl.u32 %v125, 7
    %v127 = vsub.s32 %v124, %v126
    %v128 = vrot.slane %v121, %v127
    %130 = vst [vmem:[#allocation5] sm:$0xf] %v128
    %s131 = scalar_lea.vmem [#allocation2], 8
    %v132 = vld [vmem:[%s131] sm:$0xff]
    %v134 = vcombine.high %v132, %v132
    %v135 = vsel %vm43, %v132, 0
    %v137 = vsel %vm43, %v134, 0
    %139 = vmatprep.subr.mxu0 0.0
    %140 = vmatpush1.msra.mxu0 0.0
    %141 = vmatprep.subr.mxu0 0.0
    %142 = vmatpush1.msra.mxu0 0.0
    %143 = vmatprep.subr.mxu0 0.0
    %144 = vmatpush1.msra.mxu0 0.0
    %145 = vmatprep.subr.mxu0 0.0
    %146 = vmatpush1.msra.mxu0 0.0
    %147 = vmatprep.subr.mxu0 0.0
    %148 = vmatpush1.msra.mxu0 0.0
    %149 = vmatprep.subr.mxu0 0.0
    %150 = vmatpush1.msra.mxu0 0.0
    %151 = vmatprep.subr.mxu0 0.0
    %152 = vmatpush1.msra.mxu0 0.0
    %153 = vmatprep.subr.mxu0 0.0
    %154 = vmatpush1.msra.mxu0 0.0
    %155 = vmatprep.subr.mxu0 0.0
    %156 = vmatpush1.msra.mxu0 0.0
    %157 = vmatprep.subr.mxu0 0.0
    %158 = vmatpush1.msra.mxu0 0.0
    %159 = vmatprep.subr.mxu0 0.0
    %160 = vmatpush1.msra.mxu0 0.0
    %161 = vmatprep.subr.mxu0 0.0
    %162 = vmatpush1.msra.mxu0 0.0
    %163 = vmatprep.subr.mxu0 0.0
    %164 = vmatpush1.msra.mxu0 0.0
    %165 = vmatprep.subr.mxu0 0.0
    %166 = vmatpush1.msra.mxu0 0.0
    %167 = vmatprep.subr.mxu0 0.0
    %168 = vmatpush1.msra.mxu0 0.0
    %169 = vmatprep.subr.mxu0 %v137
    %170 = vmatpush1.msra.mxu0 %v135
    %171 = vmatprep.subr.mxu0 0.0
    %172 = vmatpush2.msra.mxu0 0.0
    %173 = vmatprep.subr.mxu0 0.0
    %174 = vmatpush2.msra.mxu0 0.0
    %175 = vmatprep.subr.mxu0 0.0
    %176 = vmatpush2.msra.mxu0 0.0
    %177 = vmatprep.subr.mxu0 0.0
    %178 = vmatpush2.msra.mxu0 0.0
    %179 = vmatprep.subr.mxu0 0.0
    %180 = vmatpush2.msra.mxu0 0.0
    %181 = vmatprep.subr.mxu0 0.0
    %182 = vmatpush2.msra.mxu0 0.0
    %183 = vmatprep.subr.mxu0 0.0
    %184 = vmatpush2.msra.mxu0 0.0
    %185 = vmatprep.subr.mxu0 0.0
    %186 = vmatpush2.msra.mxu0 0.0
    %187 = vmatprep.subr.mxu0 0.0
    %188 = vmatpush2.msra.mxu0 0.0
    %189 = vmatprep.subr.mxu0 0.0
    %190 = vmatpush2.msra.mxu0 0.0
    %191 = vmatprep.subr.mxu0 0.0
    %192 = vmatpush2.msra.mxu0 0.0
    %193 = vmatprep.subr.mxu0 0.0
    %194 = vmatpush2.msra.mxu0 0.0
    %195 = vmatprep.subr.mxu0 0.0
    %196 = vmatpush2.msra.mxu0 0.0
    %197 = vmatprep.subr.mxu0 0.0
    %198 = vmatpush2.msra.mxu0 0.0
    %199 = vmatprep.subr.mxu0 0.0
    %200 = vmatpush2.msra.mxu0 0.0
    %201 = vmatprep.subr.mxu0 0.0
    %202 = vmatpush2.msra.mxu0 0.0
    %203 = vmatprep.mubr.f32.mxu0 0.0
    %204 = vmatmul.mubr.f32.gmra.mxu0 %v41
    %v205 = vpop.f32.mrf.mxu0
    %v206 = vadd.f32 %v35, %v205
    %v207 = vpop.f32.mrf.mxu0
    %v208 = vadd.f32 %v35, %v207
    %209 = vdwg.mxu0
    %v212 = vcombine.low %v206, %v208
    %v214 = vunpack.c.l.s4 1983009808
    %v215 = vunpack.c.0.s8 %v214
    %v216 = vlaneseq
    %v217 = vshrl.u32 %v216, 7
    %v218 = vsub.s32 %v215, %v217
    %v219 = vrot.slane %v212, %v218
    %s221 = scalar_lea.vmem [#allocation5], 4
    %222 = vst [vmem:[%s221] sm:$0xf] %v219
    // Predicated region
    $region18: #{tpu_custom_call.1} parent=1 // pred_check
      _
    $region19: #{tpu_custom_call.1} parent=1 // pred_check_branch
      %224 = sbr.rel (0) target = $region21
    $region20: #{tpu_custom_call.1} parent=1 // pred_region
      %s226 = ssub.s32 128, 128
      %227 = vsyncadd [#allocation4], %s226
      %s228 = sshll.u32 [#allocation5], 4
      %s229 = int_to_ptr.vmem [resolvable:$true] %s228
      %234 = dma.vmem_to_hbm [thread:$0]  %s229, 128, %s3, [#allocation4], 64, 64, 4
    $region21: #{tpu_custom_call.1} parent=1 // pred_fallthru
      _
    // Predicated region
    $region22: #{tpu_custom_call.1} parent=1 // pred_check
      _
    $region23: #{tpu_custom_call.1} parent=1 // pred_check_branch
      %236 = sbr.rel (0) target = $region25
    $region24: #{tpu_custom_call.1} parent=1 // pred_region
      %237 = dma.done [#allocation4], 128
    $region25: #{tpu_custom_call.1} parent=1 // pred_fallthru
      _
    %238 = vsyncpa [#allocation3], 1
    %239 = vsyncpa [#allocation4], 1

</llo_original>
